<compile_context>
chip_gen: v6e
topology: v6e:2x2x1
jax: 0.10.0
libtpu: 0.0.40
codegen_flags: <defaults>
</compile_context>

<pallas_src>
import functools
import math

import jax
import jax.numpy as jnp
import numpy as np
from jax.experimental import pallas as pl
from jax.experimental.pallas import tpu as pltpu


# ---------------------------------------------------------------------------
# Hardware-aware sizing helpers
# ---------------------------------------------------------------------------

def _vmem_limit_bytes():
    """Generation-aware VMEM budget (v5e/v6e: 128 MiB, v7x: 64 MiB per TC)."""
    cap = 64 * 1024 * 1024
    try:
        cap = int(getattr(pltpu.get_tpu_info(), "vmem_capacity_bytes", cap))
    except Exception:
        pass
    return int(min(cap * 0.7, 96 * 1024 * 1024))


def _pick_hw_tile(hw, c, itemsize, budget_bytes):
    """Pick (hwb, acc_w).

    hwb   : lane-tile width for the spatial axis (multiple of acc_w, never wider
            than hw rounded down to 128; ragged tails are masked / clipped).
    acc_w : lane width of the persistent f32 accumulators -- kept small so the
            per-tile fold holds them in vregs and the VMEM scratch stays tiny.
    """
    if hw <= 128:
        return hw, hw                              # full-dim block (always legal)
    acc_w = max(128, min(512, ((16384 // max(c, 1)) // 128) * 128))
    max_lanes = max(acc_w, ((budget_bytes // (itemsize * c)) // acc_w) * acc_w)
    hwb = min(max_lanes, (hw // acc_w) * acc_w)
    if hwb < acc_w:                                # hw in [128, acc_w)
        hwb = (hw // 128) * 128
        acc_w = hwb
    return hwb, acc_w


# ---------------------------------------------------------------------------
# Shared per-channel math (tiny, runs once per forward)
# ---------------------------------------------------------------------------

def _fold_scale_bias(mean, var, combine, gamma, beta, eps):
    """Fold BN affine + combine into per-channel scale/bias: out = x*scale+bias."""
    inv_std = jax.lax.rsqrt(var + eps)
    scale = gamma * inv_std * combine
    bias = (beta - gamma * mean * inv_std) * combine
    return scale, bias


def _combine_in_kernel(mean, var, indexmean, indexvar, w0_ref, w1_ref, ks, pad, c):
    """combine = sigmoid(conv1(relu(conv0([meanmix; varmix])))) on (c,1) columns.

    Used only by the fused path (gated to c <= 256 so the masked band matmul for
    the channel shift is a few-hundred-KiB, once-only epilogue).
    """
    meanmix = indexmean * mean                                     # (c, 1)
    varmix = indexvar * jnp.sqrt(var)                              # (c, 1)
    # conv0: Conv2d(1, ks, kernel=(2,1)), no bias, + ReLU -> ks column vectors.
    c0 = [jnp.maximum(w0_ref[i, 0] * meanmix + w0_ref[i, 1] * varmix, 0.0)
          for i in range(ks)]
    # conv1: Conv1d(ks, 1, kernel=ks, padding=pad) over channels:
    #   out[ch] = sum_{i,j} w1[i,j] * c0[i][ch + j - pad]   (zero outside [0,c))
    r_iota = jax.lax.broadcasted_iota(jnp.int32, (c, c), 0)
    c_iota = jax.lax.broadcasted_iota(jnp.int32, (c, c), 1)
    acc = jnp.zeros((c, 1), jnp.float32)
    for j in range(ks):
        h = c0[0] * w1_ref[0, j]
        for i in range(1, ks):
            h = h + c0[i] * w1_ref[i, j]                           # (c, 1) VPU
        d = j - pad
        shift = (c_iota - r_iota == d).astype(jnp.float32)         # shift-by-d band
        acc = acc + jnp.dot(shift, h, preferred_element_type=jnp.float32)
    return 1.0 / (1.0 + jnp.exp(-acc))                             # sigmoid, (c,1)


def _combine_in_xla(mean, var, indexmean, indexvar, w0, w1, ks, pad, c):
    """Same combine, computed in plain XLA on (C,)-sized data (two-phase path)."""
    meanmix = (indexmean * mean)[:, 0]                             # (C,)
    varmix = (indexvar * jnp.sqrt(var))[:, 0]
    comb = jnp.stack([meanmix, varmix], axis=0)                    # (2, C)
    c0 = jax.nn.relu(w0 @ comb)                                    # (ks, C)
    c0p = jnp.pad(c0, ((0, 0), (pad, pad)))
    out = jnp.zeros((c,), jnp.float32)
    for j in range(ks):
        out = out + w1[:, j] @ c0p[:, j:j + c]
    return jax.nn.sigmoid(out)[:, None]                            # (C, 1)


# ---------------------------------------------------------------------------
# Kernels
# ---------------------------------------------------------------------------

def _fused_kernel(x_ref, g_ref, b_ref, rm_ref, rv_ref, w0_ref, w1_ref, o_ref,
                  *, ks, pad, eps, inv_count, inv_sqrt_n, c):
    """Single-call path: stats + combine + normalize with x resident in VMEM."""
    x = x_ref[...].astype(jnp.float32)                             # (N, C, HW)
    s1 = jnp.sum(jnp.sum(x, axis=2, keepdims=True), axis=0)        # (C, 1)
    s2 = jnp.sum(jnp.sum(x * x, axis=2, keepdims=True), axis=0)    # (C, 1)
    mean = s1 * inv_count
    var = jnp.maximum(s2 * inv_count - mean * mean, 0.0)           # biased variance

    indexmean = jnp.sum(rm_ref[...], axis=0, keepdims=True) * (inv_sqrt_n / c)
    indexvar = jnp.sum(jnp.sqrt(rv_ref[...]), axis=0, keepdims=True) * (inv_sqrt_n / c)
    combine = _combine_in_kernel(mean, var, indexmean, indexvar,
                                 w0_ref, w1_ref, ks, pad, c)
    scale, bias = _fold_scale_bias(mean, var, combine, g_ref[...], b_ref[...], eps)
    o_ref[...] = (x * scale[None] + bias[None]).astype(o_ref.dtype)


def _stats_kernel(x_ref, s1_ref, s2_ref, psum_ref, psq_ref,
                  *, acc_w, n_chunks, hw, hwb, ragged, unroll):
    """Phase 1: per-n streaming per-channel sum / sum-of-squares.

    Accumulators are carried through a fori_loop (in vregs when they fit) and
    persisted in a small (C, acc_w) VMEM scratch across spatial tiles.
    """
    h = pl.program_id(1)

    @pl.when(h == 0)
    def _():
        psum_ref[...] = jnp.zeros_like(psum_ref)
        psq_ref[...] = jnp.zeros_like(psq_ref)

    base = h * hwb                                   # element offset of this tile

    def fold(k, carry):
        ps, pq = carry
        off = pl.multiple_of(k * acc_w, acc_w)
        chunk = x_ref[0, :, pl.ds(off, acc_w)].astype(jnp.float32)   # (C, acc_w)
        if ragged:
            lane = (jax.lax.broadcasted_iota(jnp.int32, (1, acc_w), 1)
                    + (base + off))
            chunk = jnp.where(lane < hw, chunk, 0.0)
        return ps + chunk, pq + chunk * chunk

    ps, pq = jax.lax.fori_loop(0, n_chunks, fold,
                               (psum_ref[...], psq_ref[...]), unroll=unroll)
    psum_ref[...] = ps
    psq_ref[...] = pq

    @pl.when(h == pl.num_programs(1) - 1)
    def _():
        # Single cross-lane reduce per (n).
        s1_ref[0] = jnp.sum(ps, axis=1, keepdims=True)             # (C, 1)
        s2_ref[0] = jnp.sum(pq, axis=1, keepdims=True)


def _norm_kernel(x_ref, scale_ref, bias_ref, o_ref):
    """Phase 2: pure streaming normalize+rescale: out = x*scale + bias."""
    x = x_ref[0].astype(jnp.float32)                               # (C, HWb)
    o_ref[0] = (x * scale_ref[...] + bias_ref[...]).astype(o_ref.dtype)


# ---------------------------------------------------------------------------
# Wrapper
# ---------------------------------------------------------------------------

def newbn_forward(x_nchw, gamma, beta, running_mean, running_var, w0, w1,
                  eps=1e-5, force_two_phase=False):
    N, C, H, W = x_nchw.shape
    HW = H * W
    ks = w0.shape[0]
    pad = (ks - 1) // 2
    inv_count = 1.0 / float(N * HW)
    inv_sqrt_n = 1.0 / math.sqrt(C * H * W)
    itemsize = jnp.dtype(x_nchw.dtype).itemsize
    vmem_limit = _vmem_limit_bytes()

    # Free (metadata-only) view of the NCHW tensor: spatial axis last, lane-dense.
    x3 = x_nchw.reshape(N, C, HW)
    g2 = gamma.reshape(C, 1).astype(jnp.float32)
    b2 = beta.reshape(C, 1).astype(jnp.float32)
    rm2 = running_mean.reshape(C, 1).astype(jnp.float32)
    rv2 = running_var.reshape(C, 1).astype(jnp.float32)
    w0f = w0.astype(jnp.float32)                                   # (ks, 2) -> SMEM
    w1f = w1.astype(jnp.float32)                                   # (ks, ks) -> SMEM

    # ---- Fused single-call path: 1 HBM read + 1 write of x -------------------
    x_f32_bytes = N * C * HW * 4
    if (not force_two_phase) and (x_f32_bytes * 6 <= vmem_limit) and (C <= 256):
        fused = functools.partial(
            _fused_kernel, ks=ks, pad=pad, eps=eps,
            inv_count=inv_count, inv_sqrt_n=inv_sqrt_n, c=C)
        out3 = pl.pallas_call(
            fused,
            out_shape=jax.ShapeDtypeStruct((N, C, HW), x_nchw.dtype),
            grid=(1,),
            in_specs=[
                pl.BlockSpec((N, C, HW), lambda i: (0, 0, 0)),
                pl.BlockSpec((C, 1), lambda i: (0, 0)),
                pl.BlockSpec((C, 1), lambda i: (0, 0)),
                pl.BlockSpec((C, 1), lambda i: (0, 0)),
                pl.BlockSpec((C, 1), lambda i: (0, 0)),
                pl.BlockSpec(memory_space=pltpu.MemorySpace.SMEM),
                pl.BlockSpec(memory_space=pltpu.MemorySpace.SMEM),
            ],
            out_specs=pl.BlockSpec((N, C, HW), lambda i: (0, 0, 0)),
            compiler_params=pltpu.CompilerParams(
                dimension_semantics=("arbitrary",),
                vmem_limit_bytes=vmem_limit),
        )(x3, g2, b2, rm2, rv2, w0f, w1f)
        return out3.reshape(N, C, H, W)

    # ---- Two-phase streaming path --------------------------------------------
    tile_budget = max(1 << 20, min(8 << 20, vmem_limit // 10))
    hwb, acc_w = _pick_hw_tile(HW, C, itemsize, tile_budget)
    num_ht = pl.cdiv(HW, hwb)
    ragged = (HW % hwb) != 0
    n_chunks = hwb // acc_w
    unroll = min(8, n_chunks)

    stats = functools.partial(
        _stats_kernel, acc_w=acc_w, n_chunks=n_chunks,
        hw=HW, hwb=hwb, ragged=ragged, unroll=unroll)

    # Phase 1: per-(n) partial moments; N axis "parallel" (v7x megacore-friendly).
    s1, s2 = pl.pallas_call(
        stats,
        out_shape=(jax.ShapeDtypeStruct((N, C, 1), jnp.float32),
                   jax.ShapeDtypeStruct((N, C, 1), jnp.float32)),
        grid=(N, num_ht),
        in_specs=[pl.BlockSpec((1, C, hwb), lambda n, h: (n, 0, h))],
        out_specs=[pl.BlockSpec((1, C, 1), lambda n, h: (n, 0, 0)),
                   pl.BlockSpec((1, C, 1), lambda n, h: (n, 0, 0))],
        scratch_shapes=[pltpu.VMEM((C, acc_w), jnp.float32),
                        pltpu.VMEM((C, acc_w), jnp.float32)],
        compiler_params=pltpu.CompilerParams(
            dimension_semantics=("parallel", "arbitrary"),
            vmem_limit_bytes=vmem_limit),
    )(x3)

    # Tiny per-channel combine epilogue: runs once, on (C,)-sized data, plain XLA.
    s1c = jnp.sum(s1, axis=0)                                      # (C, 1)
    s2c = jnp.sum(s2, axis=0)
    mean = s1c * inv_count
    var = jnp.maximum(s2c * inv_count - mean * mean, 0.0)
    indexmean = jnp.mean(rm2) * inv_sqrt_n
    indexvar = jnp.mean(jnp.sqrt(rv2)) * inv_sqrt_n
    combine = _combine_in_xla(mean, var, indexmean, indexvar, w0f, w1f, ks, pad, C)
    scale, bias = _fold_scale_bias(mean, var, combine, g2, b2, eps)

    # Phase 2: streaming normalize + rescale, fully parallel grid.
    out3 = pl.pallas_call(
        _norm_kernel,
        out_shape=jax.ShapeDtypeStruct((N, C, HW), x_nchw.dtype),
        grid=(N, num_ht),
        in_specs=[pl.BlockSpec((1, C, hwb), lambda n, h: (n, 0, h)),
                  pl.BlockSpec((C, 1), lambda n, h: (0, 0)),
                  pl.BlockSpec((C, 1), lambda n, h: (0, 0))],
        out_specs=pl.BlockSpec((1, C, hwb), lambda n, h: (n, 0, h)),
        compiler_params=pltpu.CompilerParams(
            dimension_semantics=("parallel", "parallel"),
            vmem_limit_bytes=vmem_limit),
    )(x3, scale, bias)
    return out3.reshape(N, C, H, W)


# ---------------------------------------------------------------------------
# Pure-JAX reference + self-test
# ---------------------------------------------------------------------------

def newbn_reference(x, gamma, beta, rm, rv, w0, w1, eps=1e-5):
    """Pure-JAX reference mirroring the PyTorch forward (training mode)."""
    N, C, H, W = x.shape
    n = C * H * W
    mean = x.mean(axis=(0, 2, 3))
    var = ((x - mean[None, :, None, None]) ** 2).mean(axis=(0, 2, 3))
    indexvar = jnp.sqrt(rv).mean() / math.sqrt(n)
    indexmean = rm.mean() / math.sqrt(n)
    meanmix = indexmean * mean
    varmix = indexvar * jnp.sqrt(var)
    comb = jnp.stack([meanmix, varmix], axis=0)                    # (2, C)
    c0 = jax.nn.relu(w0 @ comb)                                    # (ks, C)
    ks = w0.shape[0]
    p = (ks - 1) // 2
    c0p = jnp.pad(c0, ((0, 0), (p, p)))
    conv1_out = jnp.stack([jnp.sum(w1 * c0p[:, cc:cc + ks]) for cc in range(C)])
    combine = jax.nn.sigmoid(conv1_out)                            # (C,)
    xn = (x - mean[None, :, None, None]) / jnp.sqrt(var[None, :, None, None] + eps)
    out = xn * gamma[None, :, None, None] + beta[None, :, None, None]
    return out * combine[None, :, None, None]


def _run_case(N, C, H, W, force_two_phase):
    key = jax.random.PRNGKey(0)
    kx, kg, kb, krm, krv, kw0, kw1 = jax.random.split(key, 7)
    t = C // 8
    ks = t if t % 2 else t + 1                                     # C=16 -> ks=3
    x = jax.random.normal(kx, (N, C, H, W), jnp.float32)
    gamma = 1.0 + 0.1 * jax.random.normal(kg, (C,), jnp.float32)   # BN weight
    beta = 0.1 * jax.random.normal(kb, (C,), jnp.float32)          # BN bias
    rm = 0.1 * jax.random.normal(krm, (C,), jnp.float32)
    rv = 0.5 + jnp.abs(jax.random.normal(krv, (C,), jnp.float32))
    w0 = jax.random.normal(kw0, (ks, 2), jnp.float32) * 0.5        # Conv2d(1,ks,(2,1))
    w1 = jax.random.normal(kw1, (ks, ks), jnp.float32) * 0.5       # Conv1d(ks,1,ks)

    fwd = jax.jit(functools.partial(newbn_forward, force_two_phase=force_two_phase))
    out = jax.block_until_ready(fwd(x, gamma, beta, rm, rv, w0, w1))
    ref = newbn_reference(x, gamma, beta, rm, rv, w0, w1)
    np.testing.assert_allclose(np.asarray(out), np.asarray(ref),
                               rtol=2e-4, atol=1e-5)


if __name__ == "__main__":
    # num_features must be >= 16 so that ks = t + 1 with t = C // 8 (ks = 3),
    # matching what the PyTorch forward actually requires to run.
    _run_case(2, 16, 16, 16, force_two_phase=False)   # fused single-call path
    _run_case(2, 16, 16, 16, force_two_phase=True)    # two-phase streaming path
    _run_case(2, 16, 12, 12, force_two_phase=True)    # ragged spatial tail (HW=144)
    _run_case(2, 16, 8, 8, force_two_phase=True)      # HW < 128 full-dim block path
    print("KERNEL_OK")
</pallas_src>

<mosaic_0001>
module attributes {stable_mosaic.version = 11 : i64} {
  func.func @_fused_kernel(%arg0: i32, %arg1: memref<2x16x256xf32, #tpu.memory_space<vmem>>, %arg2: memref<16x1xf32, #tpu.memory_space<vmem>>, %arg3: memref<16x1xf32, #tpu.memory_space<vmem>>, %arg4: memref<16x1xf32, #tpu.memory_space<vmem>>, %arg5: memref<16x1xf32, #tpu.memory_space<vmem>>, %arg6: memref<3x2xf32, #tpu.memory_space<smem>>, %arg7: memref<3x3xf32, #tpu.memory_space<smem>>, %arg8: memref<2x16x256xf32, #tpu.memory_space<vmem>>) attributes {dimension_semantics = [#tpu.dimension_semantics<arbitrary>], iteration_bounds = array<i64: 1>, scalar_prefetch = 0 : i64, scratch_operands = 0 : i64, tpu.core_type = #tpu.core_type<tc>, window_params = [{pipeline_mode = #tpu.pipeline_mode<synchronous>, transform_indices = @transform_0, window_bounds = array<i64: 2, 16, 256>}, {pipeline_mode = #tpu.pipeline_mode<synchronous>, transform_indices = @transform_1, window_bounds = array<i64: 16, 1>}, {pipeline_mode = #tpu.pipeline_mode<synchronous>, transform_indices = @transform_2, window_bounds = array<i64: 16, 1>}, {pipeline_mode = #tpu.pipeline_mode<synchronous>, transform_indices = @transform_3, window_bounds = array<i64: 16, 1>}, {pipeline_mode = #tpu.pipeline_mode<synchronous>, transform_indices = @transform_4, window_bounds = array<i64: 16, 1>}, {transform_indices = @transform_5, window_bounds = array<i64: 3, 2>}, {transform_indices = @transform_6, window_bounds = array<i64: 3, 3>}, {pipeline_mode = #tpu.pipeline_mode<synchronous>, transform_indices = @transform_7, window_bounds = array<i64: 2, 16, 256>}]} {
    %c0 = arith.constant 0 : index
    %c0_0 = arith.constant 0 : index
    %c0_1 = arith.constant 0 : index
    %0 = vector.load %arg1[%c0, %c0_0, %c0_1] : memref<2x16x256xf32, #tpu.memory_space<vmem>>, vector<2x16x256xf32>
    %cst = arith.constant dense<0.000000e+00> : vector<2x16xf32>
    %1 = vector.multi_reduction <add>, %0, %cst [2] : vector<2x16x256xf32> to vector<2x16xf32>
    %2 = vector.shape_cast %1 : vector<2x16xf32> to vector<2x16x1xf32>
    %cst_2 = arith.constant dense<0.000000e+00> : vector<16x1xf32>
    %3 = vector.multi_reduction <add>, %2, %cst_2 [0] : vector<2x16x1xf32> to vector<16x1xf32>
    %4 = arith.mulf %0, %0 : vector<2x16x256xf32>
    %cst_3 = arith.constant dense<0.000000e+00> : vector<2x16xf32>
    %5 = vector.multi_reduction <add>, %4, %cst_3 [2] : vector<2x16x256xf32> to vector<2x16xf32>
    %6 = vector.shape_cast %5 : vector<2x16xf32> to vector<2x16x1xf32>
    %cst_4 = arith.constant dense<0.000000e+00> : vector<16x1xf32>
    %7 = vector.multi_reduction <add>, %6, %cst_4 [0] : vector<2x16x1xf32> to vector<16x1xf32>
    %cst_5 = arith.constant 0.001953125 : f32
    %8 = vector.broadcast %cst_5 : f32 to vector<16x1xf32>
    %9 = arith.mulf %3, %8 : vector<16x1xf32>
    %cst_6 = arith.constant 0.001953125 : f32
    %10 = vector.broadcast %cst_6 : f32 to vector<16x1xf32>
    %11 = arith.mulf %7, %10 : vector<16x1xf32>
    %12 = arith.mulf %9, %9 : vector<16x1xf32>
    %13 = arith.subf %11, %12 : vector<16x1xf32>
    %cst_7 = arith.constant 0.000000e+00 : f32
    %14 = vector.broadcast %cst_7 : f32 to vector<16x1xf32>
    %15 = arith.maximumf %13, %14 : vector<16x1xf32>
    %c0_8 = arith.constant 0 : index
    %c0_9 = arith.constant 0 : index
    %16 = vector.load %arg4[%c0_8, %c0_9] : memref<16x1xf32, #tpu.memory_space<vmem>>, vector<16x1xf32>
    %cst_10 = arith.constant dense<0.000000e+00> : vector<1xf32>
    %17 = vector.multi_reduction <add>, %16, %cst_10 [0] : vector<16x1xf32> to vector<1xf32>
    %18 = vector.shape_cast %17 : vector<1xf32> to vector<1x1xf32>
    %cst_11 = arith.constant 9.765625E-4 : f32
    %19 = vector.broadcast %cst_11 : f32 to vector<1x1xf32>
    %20 = arith.mulf %18, %19 : vector<1x1xf32>
    %c0_12 = arith.constant 0 : index
    %c0_13 = arith.constant 0 : index
    %21 = vector.load %arg5[%c0_12, %c0_13] : memref<16x1xf32, #tpu.memory_space<vmem>>, vector<16x1xf32>
    %22 = math.sqrt %21 : vector<16x1xf32>
    %cst_14 = arith.constant dense<0.000000e+00> : vector<1xf32>
    %23 = vector.multi_reduction <add>, %22, %cst_14 [0] : vector<16x1xf32> to vector<1xf32>
    %24 = vector.shape_cast %23 : vector<1xf32> to vector<1x1xf32>
    %cst_15 = arith.constant 9.765625E-4 : f32
    %25 = vector.broadcast %cst_15 : f32 to vector<1x1xf32>
    %26 = arith.mulf %24, %25 : vector<1x1xf32>
    %27 = vector.broadcast %20 : vector<1x1xf32> to vector<16x1xf32>
    %28 = arith.mulf %27, %9 : vector<16x1xf32>
    %29 = math.sqrt %15 : vector<16x1xf32>
    %30 = vector.broadcast %26 : vector<1x1xf32> to vector<16x1xf32>
    %31 = arith.mulf %30, %29 : vector<16x1xf32>
    %c0_16 = arith.constant 0 : index
    %c0_17 = arith.constant 0 : index
    %32 = memref.load %arg6[%c0_16, %c0_17] : memref<3x2xf32, #tpu.memory_space<smem>>
    %33 = vector.broadcast %32 : f32 to vector<16x1xf32>
    %34 = arith.mulf %33, %28 : vector<16x1xf32>
    %c0_18 = arith.constant 0 : index
    %c1 = arith.constant 1 : index
    %35 = memref.load %arg6[%c0_18, %c1] : memref<3x2xf32, #tpu.memory_space<smem>>
    %36 = vector.broadcast %35 : f32 to vector<16x1xf32>
    %37 = arith.mulf %36, %31 : vector<16x1xf32>
    %38 = arith.addf %34, %37 : vector<16x1xf32>
    %cst_19 = arith.constant 0.000000e+00 : f32
    %39 = vector.broadcast %cst_19 : f32 to vector<16x1xf32>
    %40 = arith.maximumf %38, %39 : vector<16x1xf32>
    %c1_20 = arith.constant 1 : index
    %c0_21 = arith.constant 0 : index
    %41 = memref.load %arg6[%c1_20, %c0_21] : memref<3x2xf32, #tpu.memory_space<smem>>
    %42 = vector.broadcast %41 : f32 to vector<16x1xf32>
    %43 = arith.mulf %42, %28 : vector<16x1xf32>
    %c1_22 = arith.constant 1 : index
    %c1_23 = arith.constant 1 : index
    %44 = memref.load %arg6[%c1_22, %c1_23] : memref<3x2xf32, #tpu.memory_space<smem>>
    %45 = vector.broadcast %44 : f32 to vector<16x1xf32>
    %46 = arith.mulf %45, %31 : vector<16x1xf32>
    %47 = arith.addf %43, %46 : vector<16x1xf32>
    %cst_24 = arith.constant 0.000000e+00 : f32
    %48 = vector.broadcast %cst_24 : f32 to vector<16x1xf32>
    %49 = arith.maximumf %47, %48 : vector<16x1xf32>
    %c2 = arith.constant 2 : index
    %c0_25 = arith.constant 0 : index
    %50 = memref.load %arg6[%c2, %c0_25] : memref<3x2xf32, #tpu.memory_space<smem>>
    %51 = vector.broadcast %50 : f32 to vector<16x1xf32>
    %52 = arith.mulf %51, %28 : vector<16x1xf32>
    %c2_26 = arith.constant 2 : index
    %c1_27 = arith.constant 1 : index
    %53 = memref.load %arg6[%c2_26, %c1_27] : memref<3x2xf32, #tpu.memory_space<smem>>
    %54 = vector.broadcast %53 : f32 to vector<16x1xf32>
    %55 = arith.mulf %54, %31 : vector<16x1xf32>
    %56 = arith.addf %52, %55 : vector<16x1xf32>
    %cst_28 = arith.constant 0.000000e+00 : f32
    %57 = vector.broadcast %cst_28 : f32 to vector<16x1xf32>
    %58 = arith.maximumf %56, %57 : vector<16x1xf32>
    %59 = tpu.iota {dimensions = array<i32: 0>} : vector<16x16xi32>
    %60 = tpu.iota {dimensions = array<i32: 1>} : vector<16x16xi32>
    %cst_29 = arith.constant 0.000000e+00 : f32
    %61 = vector.broadcast %cst_29 : f32 to vector<16x1xf32>
    %c0_30 = arith.constant 0 : index
    %c0_31 = arith.constant 0 : index
    %62 = memref.load %arg7[%c0_30, %c0_31] : memref<3x3xf32, #tpu.memory_space<smem>>
    %63 = vector.broadcast %62 : f32 to vector<16x1xf32>
    %64 = arith.mulf %40, %63 : vector<16x1xf32>
    %c1_32 = arith.constant 1 : index
    %c0_33 = arith.constant 0 : index
    %65 = memref.load %arg7[%c1_32, %c0_33] : memref<3x3xf32, #tpu.memory_space<smem>>
    %66 = vector.broadcast %65 : f32 to vector<16x1xf32>
    %67 = arith.mulf %49, %66 : vector<16x1xf32>
    %68 = arith.addf %64, %67 : vector<16x1xf32>
    %c2_34 = arith.constant 2 : index
    %c0_35 = arith.constant 0 : index
    %69 = memref.load %arg7[%c2_34, %c0_35] : memref<3x3xf32, #tpu.memory_space<smem>>
    %70 = vector.broadcast %69 : f32 to vector<16x1xf32>
    %71 = arith.mulf %58, %70 : vector<16x1xf32>
    %72 = arith.addf %68, %71 : vector<16x1xf32>
    %73 = arith.subi %60, %59 : vector<16x16xi32>
    %c-1_i32 = arith.constant -1 : i32
    %74 = vector.broadcast %c-1_i32 : i32 to vector<16x16xi32>
    %75 = arith.cmpi eq, %73, %74 : vector<16x16xi32>
    %76 = arith.extui %75 : vector<16x16xi1> to vector<16x16xi32>
    %77 = arith.sitofp %76 : vector<16x16xi32> to vector<16x16xf32>
    %cst_36 = arith.constant dense<0.000000e+00> : vector<16x1xf32>
    %78 = tpu.matmul %77, %72, %cst_36 {dimension_numbers = #tpu.dot_dimension_numbers<[1], [0], [0], [1], [0, 0, 1, 1], [], []>} : vector<16x16xf32>, vector<16x1xf32>, vector<16x1xf32> -> vector<16x1xf32>
    %79 = arith.addf %61, %78 : vector<16x1xf32>
    %c0_37 = arith.constant 0 : index
    %c1_38 = arith.constant 1 : index
    %80 = memref.load %arg7[%c0_37, %c1_38] : memref<3x3xf32, #tpu.memory_space<smem>>
    %81 = vector.broadcast %80 : f32 to vector<16x1xf32>
    %82 = arith.mulf %40, %81 : vector<16x1xf32>
    %c1_39 = arith.constant 1 : index
    %c1_40 = arith.constant 1 : index
    %83 = memref.load %arg7[%c1_39, %c1_40] : memref<3x3xf32, #tpu.memory_space<smem>>
    %84 = vector.broadcast %83 : f32 to vector<16x1xf32>
    %85 = arith.mulf %49, %84 : vector<16x1xf32>
    %86 = arith.addf %82, %85 : vector<16x1xf32>
    %c2_41 = arith.constant 2 : index
    %c1_42 = arith.constant 1 : index
    %87 = memref.load %arg7[%c2_41, %c1_42] : memref<3x3xf32, #tpu.memory_space<smem>>
    %88 = vector.broadcast %87 : f32 to vector<16x1xf32>
    %89 = arith.mulf %58, %88 : vector<16x1xf32>
    %90 = arith.addf %86, %89 : vector<16x1xf32>
    %91 = arith.subi %60, %59 : vector<16x16xi32>
    %c0_i32 = arith.constant 0 : i32
    %92 = vector.broadcast %c0_i32 : i32 to vector<16x16xi32>
    %93 = arith.cmpi eq, %91, %92 : vector<16x16xi32>
    %94 = arith.extui %93 : vector<16x16xi1> to vector<16x16xi32>
    %95 = arith.sitofp %94 : vector<16x16xi32> to vector<16x16xf32>
    %cst_43 = arith.constant dense<0.000000e+00> : vector<16x1xf32>
    %96 = tpu.matmul %95, %90, %cst_43 {dimension_numbers = #tpu.dot_dimension_numbers<[1], [0], [0], [1], [0, 0, 1, 1], [], []>} : vector<16x16xf32>, vector<16x1xf32>, vector<16x1xf32> -> vector<16x1xf32>
    %97 = arith.addf %79, %96 : vector<16x1xf32>
    %c0_44 = arith.constant 0 : index
    %c2_45 = arith.constant 2 : index
    %98 = memref.load %arg7[%c0_44, %c2_45] : memref<3x3xf32, #tpu.memory_space<smem>>
    %99 = vector.broadcast %98 : f32 to vector<16x1xf32>
    %100 = arith.mulf %40, %99 : vector<16x1xf32>
    %c1_46 = arith.constant 1 : index
    %c2_47 = arith.constant 2 : index
    %101 = memref.load %arg7[%c1_46, %c2_47] : memref<3x3xf32, #tpu.memory_space<smem>>
    %102 = vector.broadcast %101 : f32 to vector<16x1xf32>
    %103 = arith.mulf %49, %102 : vector<16x1xf32>
    %104 = arith.addf %100, %103 : vector<16x1xf32>
    %c2_48 = arith.constant 2 : index
    %c2_49 = arith.constant 2 : index
    %105 = memref.load %arg7[%c2_48, %c2_49] : memref<3x3xf32, #tpu.memory_space<smem>>
    %106 = vector.broadcast %105 : f32 to vector<16x1xf32>
    %107 = arith.mulf %58, %106 : vector<16x1xf32>
    %108 = arith.addf %104, %107 : vector<16x1xf32>
    %109 = arith.subi %60, %59 : vector<16x16xi32>
    %c1_i32 = arith.constant 1 : i32
    %110 = vector.broadcast %c1_i32 : i32 to vector<16x16xi32>
    %111 = arith.cmpi eq, %109, %110 : vector<16x16xi32>
    %112 = arith.extui %111 : vector<16x16xi1> to vector<16x16xi32>
    %113 = arith.sitofp %112 : vector<16x16xi32> to vector<16x16xf32>
    %cst_50 = arith.constant dense<0.000000e+00> : vector<16x1xf32>
    %114 = tpu.matmul %113, %108, %cst_50 {dimension_numbers = #tpu.dot_dimension_numbers<[1], [0], [0], [1], [0, 0, 1, 1], [], []>} : vector<16x16xf32>, vector<16x1xf32>, vector<16x1xf32> -> vector<16x1xf32>
    %115 = arith.addf %97, %114 : vector<16x1xf32>
    %cst_51 = arith.constant 0.000000e+00 : f32
    %116 = vector.broadcast %cst_51 : f32 to vector<16x1xf32>
    %117 = arith.subf %116, %115 : vector<16x1xf32>
    %118 = math.exp %117 : vector<16x1xf32>
    %cst_52 = arith.constant 1.000000e+00 : f32
    %119 = vector.broadcast %cst_52 : f32 to vector<16x1xf32>
    %120 = arith.addf %119, %118 : vector<16x1xf32>
    %cst_53 = arith.constant 1.000000e+00 : f32
    %121 = vector.broadcast %cst_53 : f32 to vector<16x1xf32>
    %122 = arith.divf %121, %120 : vector<16x1xf32>
    %c0_54 = arith.constant 0 : index
    %c0_55 = arith.constant 0 : index
    %123 = vector.load %arg2[%c0_54, %c0_55] : memref<16x1xf32, #tpu.memory_space<vmem>>, vector<16x1xf32>
    %c0_56 = arith.constant 0 : index
    %c0_57 = arith.constant 0 : index
    %124 = vector.load %arg3[%c0_56, %c0_57] : memref<16x1xf32, #tpu.memory_space<vmem>>, vector<16x1xf32>
    %cst_58 = arith.constant 9.99999974E-6 : f32
    %125 = vector.broadcast %cst_58 : f32 to vector<16x1xf32>
    %126 = arith.addf %15, %125 : vector<16x1xf32>
    %127 = math.rsqrt %126 : vector<16x1xf32>
    %128 = arith.mulf %123, %127 : vector<16x1xf32>
    %129 = arith.mulf %128, %122 : vector<16x1xf32>
    %130 = arith.mulf %123, %9 : vector<16x1xf32>
    %131 = arith.mulf %130, %127 : vector<16x1xf32>
    %132 = arith.subf %124, %131 : vector<16x1xf32>
    %133 = arith.mulf %132, %122 : vector<16x1xf32>
    %134 = vector.shape_cast %129 : vector<16x1xf32> to vector<1x16x1xf32>
    %135 = vector.broadcast %134 : vector<1x16x1xf32> to vector<2x16x256xf32>
    %136 = arith.mulf %0, %135 : vector<2x16x256xf32>
    %137 = vector.shape_cast %133 : vector<16x1xf32> to vector<1x16x1xf32>
    %138 = vector.broadcast %137 : vector<1x16x1xf32> to vector<2x16x256xf32>
    %139 = arith.addf %136, %138 : vector<2x16x256xf32>
    %c0_59 = arith.constant 0 : index
    %c0_60 = arith.constant 0 : index
    %c0_61 = arith.constant 0 : index
    %140 = vector.load %arg8[%c0_59, %c0_60, %c0_61] : memref<2x16x256xf32, #tpu.memory_space<vmem>>, vector<2x16x256xf32>
    tpu.vector_store %arg8[%c0_59, %c0_60, %c0_61], %139 {strides = array<i32>} : memref<2x16x256xf32, #tpu.memory_space<vmem>>, vector<2x16x256xf32>,
    return
  }
  func.func @transform_0(%arg0: i32) -> (i32, i32, i32) {
    %c0_i32 = arith.constant 0 : i32
    %c0_i32_0 = arith.constant 0 : i32
    %c0_i32_1 = arith.constant 0 : i32
    %c0_i32_2 = arith.constant 0 : i32
    return %c0_i32, %c0_i32_0, %c0_i32_1 : i32, i32, i32
  }
  func.func @transform_1(%arg0: i32) -> (i32, i32) {
    %c0_i32 = arith.constant 0 : i32
    %c0_i32_0 = arith.constant 0 : i32
    %c0_i32_1 = arith.constant 0 : i32
    return %c0_i32, %c0_i32_0 : i32, i32
  }
  func.func @transform_2(%arg0: i32) -> (i32, i32) {
    %c0_i32 = arith.constant 0 : i32
    %c0_i32_0 = arith.constant 0 : i32
    %c0_i32_1 = arith.constant 0 : i32
    return %c0_i32, %c0_i32_0 : i32, i32
  }
  func.func @transform_3(%arg0: i32) -> (i32, i32) {
    %c0_i32 = arith.constant 0 : i32
    %c0_i32_0 = arith.constant 0 : i32
    %c0_i32_1 = arith.constant 0 : i32
    return %c0_i32, %c0_i32_0 : i32, i32
  }
  func.func @transform_4(%arg0: i32) -> (i32, i32) {
    %c0_i32 = arith.constant 0 : i32
    %c0_i32_0 = arith.constant 0 : i32
    %c0_i32_1 = arith.constant 0 : i32
    return %c0_i32, %c0_i32_0 : i32, i32
  }
  func.func @transform_5(%arg0: i32) -> (i32, i32) {
    %c0_i32 = arith.constant 0 : i32
    %c0_i32_0 = arith.constant 0 : i32
    %c0_i32_1 = arith.constant 0 : i32
    return %c0_i32, %c0_i32_0 : i32, i32
  }
  func.func @transform_6(%arg0: i32) -> (i32, i32) {
    %c0_i32 = arith.constant 0 : i32
    %c0_i32_0 = arith.constant 0 : i32
    %c0_i32_1 = arith.constant 0 : i32
    return %c0_i32, %c0_i32_0 : i32, i32
  }
  func.func @transform_7(%arg0: i32) -> (i32, i32, i32) {
    %c0_i32 = arith.constant 0 : i32
    %c0_i32_0 = arith.constant 0 : i32
    %c0_i32_1 = arith.constant 0 : i32
    %c0_i32_2 = arith.constant 0 : i32
    return %c0_i32, %c0_i32_0, %c0_i32_1 : i32, i32, i32
  }
}

</mosaic_0001>

<llo_original>
// kernel: newbn_forward.1
$region0: #{newbn_forward.1}
  #allocation0 [shape = 'u32[]', space=smem, size = 0x4, offset = 0x4, fixed_abs, tag = 'smem constant byte address 0x4 - core index']
  #allocation1 [shape = 'u32[144,128]{1,0:T(1,128)}', space=vmem, size = 0x12000, scoped, tag = 'internal scratch']
  %s0 = inlined_call_operand.vmem [shape: f32[2,16,256], index: 0, kind: input, shape index: {}]
  %s1 = inlined_call_operand.vmem [shape: f32[16,1], index: 1, kind: input, shape index: {}]
  %s2 = inlined_call_operand.vmem [shape: f32[16,1], index: 2, kind: input, shape index: {}]
  %s3 = inlined_call_operand.vmem [shape: f32[16,1], index: 3, kind: input, shape index: {}]
  %s4 = inlined_call_operand.vmem [shape: f32[16,1], index: 4, kind: input, shape index: {}]
  %s5 = inlined_call_operand.vmem [shape: f32[3,2], index: 5, kind: input, shape index: {}]
  %s6 = inlined_call_operand.vmem [shape: f32[3,3], index: 6, kind: input, shape index: {}]
  %s7 = inlined_call_operand.vmem [shape: f32[2,16,256], index: 7, kind: output, shape index: {}]
  %s8 = sld [smem:[#allocation0]]
  $region46: #{newbn_forward.1} parent=0
    _
  %s10 = ssub.s32 1, %s8
  %s11 = scalar_select 0, %s10, %s8
  $region1: #{newbn_forward.1} parent=0
    #allocation2 [shape = 'u8[2048]{0}', space=smem, size = 0x800, scoped, tag = 'input window, operand 5, single buffered']
    #allocation3 [shape = 's32[1]{0}', space=sflag, size = 0x4, scoped, tag = 'scoped memory for newbn_forward.1']
    #allocation4 [shape = 'u8[2048]{0}', space=smem, size = 0x800, scoped, tag = 'input window, operand 6, single buffered']
    #allocation5 [shape = 's32[1]{0}', space=sflag, size = 0x4, scoped, tag = 'scoped memory for newbn_forward.1']
    %12 = vsyncpa [#allocation3], 0
    %13 = vsyncpa [#allocation5], 0
    // Predicated region
    $region2: #{newbn_forward.1} parent=1 // pred_check
      _
    $region3: #{newbn_forward.1} parent=1 // pred_check_branch
      %15 = sbr.rel (0) target = $region5
    $region4: #{newbn_forward.1} parent=1 // pred_region
      _
    $region5: #{newbn_forward.1} parent=1 // pred_fallthru
      _
    // Predicated region
    $region6: #{newbn_forward.1} parent=1 // pred_check
      _
    $region7: #{newbn_forward.1} parent=1 // pred_check_branch
      %17 = sbr.rel (0) target = $region9
    $region8: #{newbn_forward.1} parent=1 // pred_region
      _
    $region9: #{newbn_forward.1} parent=1 // pred_fallthru
      _
    // Predicated region
    $region10: #{newbn_forward.1} parent=1 // pred_check
      _
    $region11: #{newbn_forward.1} parent=1 // pred_check_branch
      %19 = sbr.rel (0) target = $region13
    $region12: #{newbn_forward.1} parent=1 // pred_region
      _
    $region13: #{newbn_forward.1} parent=1 // pred_fallthru
      _
    // Predicated region
    $region14: #{newbn_forward.1} parent=1 // pred_check
      _
    $region15: #{newbn_forward.1} parent=1 // pred_check_branch
      %21 = sbr.rel (0) target = $region17
    $region16: #{newbn_forward.1} parent=1 // pred_region
      _
    $region17: #{newbn_forward.1} parent=1 // pred_fallthru
      _
    // Predicated region
    $region18: #{newbn_forward.1} parent=1 // pred_check
      _
    $region19: #{newbn_forward.1} parent=1 // pred_check_branch
      %23 = sbr.rel (0) target = $region21
    $region20: #{newbn_forward.1} parent=1 // pred_region
      _
    $region21: #{newbn_forward.1} parent=1 // pred_fallthru
      _
    // Predicated region
    $region22: #{newbn_forward.1} parent=1 // pred_check
      _
    $region23: #{newbn_forward.1} parent=1 // pred_check_branch
      %25 = sbr.rel (0) target = $region25
    $region24: #{newbn_forward.1} parent=1 // pred_region
      %s27 = ssub.s32 64, 64
      %28 = vsyncadd [#allocation3], %s27
      %s30 = sshll.u32 %s5, 4
      %s31 = int_to_ptr.vmem [resolvable:$true] %s30
      %33 = dma.vmem_to_smem %s31, 64, [#allocation2], [#allocation3]
    $region25: #{newbn_forward.1} parent=1 // pred_fallthru
      _
    // Predicated region
    $region26: #{newbn_forward.1} parent=1 // pred_check
      _
    $region27: #{newbn_forward.1} parent=1 // pred_check_branch
      %35 = sbr.rel (0) target = $region29
    $region28: #{newbn_forward.1} parent=1 // pred_region
      %s37 = ssub.s32 64, 64
      %38 = vsyncadd [#allocation5], %s37
      %s40 = sshll.u32 %s6, 4
      %s41 = int_to_ptr.vmem [resolvable:$true] %s40
      %43 = dma.vmem_to_smem %s41, 64, [#allocation4], [#allocation5]
    $region29: #{newbn_forward.1} parent=1 // pred_fallthru
      _
    // Predicated region
    $region30: #{newbn_forward.1} parent=1 // pred_check
      _
    $region31: #{newbn_forward.1} parent=1 // pred_check_branch
      %45 = sbr.rel (0) target = $region33
    $region32: #{newbn_forward.1} parent=1 // pred_region
      %46 = dma.done [#allocation3], 64
    $region33: #{newbn_forward.1} parent=1 // pred_fallthru
      _
    // Predicated region
    $region34: #{newbn_forward.1} parent=1 // pred_check
      _
    $region35: #{newbn_forward.1} parent=1 // pred_check_branch
      %48 = sbr.rel (0) target = $region37
    $region36: #{newbn_forward.1} parent=1 // pred_region
      %49 = dma.done [#allocation5], 64
    $region37: #{newbn_forward.1} parent=1 // pred_fallthru
      _
    %50 = sfence
    %v51 = vld [vmem:[%s0] sm:$0xff]
    %v52 = vld [vmem:[%s0 + $0x8] sm:$0xff]
    %v53 = vld [vmem:[%s0 + $0x10] sm:$0xff]
    %v54 = vld [vmem:[%s0 + $0x18] sm:$0xff]
    %v55 = vld [vmem:[%s0 + $0x20] sm:$0xff]
    %v56 = vld [vmem:[%s0 + $0x28] sm:$0xff]
    %v57 = vld [vmem:[%s0 + $0x30] sm:$0xff]
    %v58 = vld [vmem:[%s0 + $0x38] sm:$0xff]
    %v59 = vadd.f32 %v51, %v52
    %60 = vadd.xlane.f32.xlu0 %v59
    %v61 = vpop.xlane.xlu0 %60
    %v62 = vadd.f32 %v53, %v54
    %63 = vadd.xlane.f32.xlu0 %v62
    %v64 = vpop.xlane.xlu0 %63
    %v65 = vadd.f32 %v55, %v56
    %66 = vadd.xlane.f32.xlu0 %v65
    %v67 = vpop.xlane.xlu0 %66
    %v68 = vadd.f32 %v57, %v58
    %69 = vadd.xlane.f32.xlu0 %v68
    %v70 = vpop.xlane.xlu0 %69
    %v71 = vadd.f32 %v61, %v67
    %v72 = vadd.f32 %v64, %v70
    %v73 = vmul.f32 %v51, %v51
    %v74 = vmul.f32 %v52, %v52
    %v75 = vmul.f32 %v53, %v53
    %v76 = vmul.f32 %v54, %v54
    %v77 = vmul.f32 %v55, %v55
    %v78 = vmul.f32 %v56, %v56
    %v79 = vmul.f32 %v57, %v57
    %v80 = vmul.f32 %v58, %v58
    %v81 = vadd.f32 %v73, %v74
    %82 = vadd.xlane.f32.xlu0 %v81
    %v83 = vpop.xlane.xlu0 %82
    %v84 = vadd.f32 %v75, %v76
    %85 = vadd.xlane.f32.xlu0 %v84
    %v86 = vpop.xlane.xlu0 %85
    %v87 = vadd.f32 %v77, %v78
    %88 = vadd.xlane.f32.xlu0 %v87
    %v89 = vpop.xlane.xlu0 %88
    %v90 = vadd.f32 %v79, %v80
    %91 = vadd.xlane.f32.xlu0 %v90
    %v92 = vpop.xlane.xlu0 %91
    %v93 = vadd.f32 %v83, %v89
    %v94 = vadd.f32 %v86, %v92
    %v95 = vmul.f32 %v71, 0.001953125
    %v96 = vmul.f32 %v72, 0.001953125
    %v97 = vmul.f32 %v93, 0.001953125
    %v98 = vmul.f32 %v94, 0.001953125
    %v99 = vmul.f32 %v95, %v95
    %v100 = vmul.f32 %v96, %v96
    %v101 = vsub.f32 %v97, %v99
    %v102 = vsub.f32 %v98, %v100
    %v103 = vmax.f32 %v101, 0.0
    %v104 = vmax.f32 %v102, 0.0
    %v105 = vld [vmem:[%s3] sm:$0xff]
    %v106 = vld [vmem:[%s3 + $0x8] sm:$0xff]
    %vm107 = vcmask 7168
    %v108 = vsel %vm107, %v105, 0.0
    %v109 = vsel %vm107, %v106, 0.0
    %v110 = vadd.f32 %v108, %v109
    %v111 = vrot.slane %v110, 4
    %v112 = vadd.f32 %v110, %v111
    %v113 = vrot.slane %v112, 2
    %v114 = vadd.f32 %v112, %v113
    %v115 = vrot.slane %v114, 1
    %v116 = vadd.f32 %v114, %v115
    %v117 = vmul.f32 %v116, 0.0009765625
    %v118 = vld [vmem:[%s4] sm:$0xff]
    %v119 = vld [vmem:[%s4 + $0x8] sm:$0xff]
    %v120 = vrsqrt.pop %v118
    %v121 = vmul.f32 %v118, %v120
    %vm122 = vcmp.eq.f32.partialorder %v118, inf
    %v123 = vsel %vm122, %v118, %v121
    %vm124 = vcmp.eq.f32.partialorder %v118, 0.0
    %v125 = vand.u32 %v118, 2147483648
    %v126 = vsel %vm124, %v125, %v123
    %v127 = vrsqrt.pop %v119
    %v128 = vmul.f32 %v119, %v127
    %vm129 = vcmp.eq.f32.partialorder %v119, inf
    %v130 = vsel %vm129, %v119, %v128
    %vm131 = vcmp.eq.f32.partialorder %v119, 0.0
    %v132 = vand.u32 %v119, 2147483648
    %v133 = vsel %vm131, %v132, %v130
    %v134 = vsel %vm107, %v126, 0.0
    %v135 = vsel %vm107, %v133, 0.0
    %v136 = vadd.f32 %v134, %v135
    %v137 = vrot.slane %v136, 4
    %v138 = vadd.f32 %v136, %v137
    %v139 = vrot.slane %v138, 2
    %v140 = vadd.f32 %v138, %v139
    %v141 = vrot.slane %v140, 1
    %v142 = vadd.f32 %v140, %v141
    %v143 = vmul.f32 %v142, 0.0009765625
    %v144 = vmul.f32 %v117, %v95
    %v145 = vmul.f32 %v117, %v96
    %v146 = vrsqrt.pop %v103
    %v147 = vmul.f32 %v103, %v146
    %vm148 = vcmp.eq.f32.partialorder %v103, inf
    %v149 = vsel %vm148, %v103, %v147
    %vm150 = vcmp.eq.f32.partialorder %v103, 0.0
    %v151 = vand.u32 %v103, 2147483648
    %v152 = vsel %vm150, %v151, %v149
    %v153 = vrsqrt.pop %v104
    %v154 = vmul.f32 %v104, %v153
    %vm155 = vcmp.eq.f32.partialorder %v104, inf
    %v156 = vsel %vm155, %v104, %v154
    %vm157 = vcmp.eq.f32.partialorder %v104, 0.0
    %v158 = vand.u32 %v104, 2147483648
    %v159 = vsel %vm157, %v158, %v156
    %v160 = vmul.f32 %v143, %v152
    %v161 = vmul.f32 %v143, %v159
    %s162 = sld [smem:[#allocation2]]
    %v163 = vstv %s162
    %v164 = vmul.f32 %v163, %v144
    %v165 = vmul.f32 %v163, %v145
    %s166 = sld [smem:[#allocation2 + $0x1]]
    %v167 = vstv %s166
    %v168 = vmul.f32 %v167, %v160
    %v169 = vmul.f32 %v167, %v161
    %v170 = vadd.f32 %v164, %v168
    %v171 = vadd.f32 %v165, %v169
    %v172 = vmax.f32 %v170, 0.0
    %v173 = vmax.f32 %v171, 0.0
    %s174 = sld [smem:[#allocation2 + $0x80]]
    %v175 = vstv %s174
    %v176 = vmul.f32 %v175, %v144
    %v177 = vmul.f32 %v175, %v145
    %s178 = sld [smem:[#allocation2 + $0x81]]
    %v179 = vstv %s178
    %v180 = vmul.f32 %v179, %v160
    %v181 = vmul.f32 %v179, %v161
    %v182 = vadd.f32 %v176, %v180
    %v183 = vadd.f32 %v177, %v181
    %v184 = vmax.f32 %v182, 0.0
    %v185 = vmax.f32 %v183, 0.0
    %s186 = sld [smem:[#allocation2 + $0x100]]
    %v187 = vstv %s186
    %v188 = vmul.f32 %v187, %v144
    %v189 = vmul.f32 %v187, %v145
    %s190 = sld [smem:[#allocation2 + $0x101]]
    %v191 = vstv %s190
    %v192 = vmul.f32 %v191, %v160
    %v193 = vmul.f32 %v191, %v161
    %v194 = vadd.f32 %v188, %v192
    %v195 = vadd.f32 %v189, %v193
    %v196 = vmax.f32 %v194, 0.0
    %v197 = vmax.f32 %v195, 0.0
    %v198 = vlaneseq
    %v199 = vshrl.u32 %v198, 7
    %v200 = vadd.s32 %v199, 8
    %v201 = vlaneseq
    %v202 = vand.u32 %v201, 127
    %s203 = sld [smem:[#allocation4]]
    %v204 = vstv %s203
    %v205 = vmul.f32 %v172, %v204
    %v206 = vmul.f32 %v173, %v204
    %s207 = sld [smem:[#allocation4 + $0x80]]
    %v208 = vstv %s207
    %v209 = vmul.f32 %v184, %v208
    %v210 = vmul.f32 %v185, %v208
    %v211 = vadd.f32 %v205, %v209
    %v212 = vadd.f32 %v206, %v210
    %s213 = sld [smem:[#allocation4 + $0x100]]
    %v214 = vstv %s213
    %v215 = vmul.f32 %v196, %v214
    %v216 = vmul.f32 %v197, %v214
    %v217 = vadd.f32 %v211, %v215
    %v218 = vadd.f32 %v212, %v216
    %v219 = vsub.s32 %v202, %v199
    %v220 = vsub.s32 %v202, %v200
    %vm221 = vcmp.eq.s32.totalorder %v219, 4294967295
    %vm222 = vcmp.eq.s32.totalorder %v220, 4294967295
    %v223 = vsel %vm221, 1, 0
    %v224 = vsel %vm222, 1, 0
    %v225 = vcvt.s32.f32 %v223
    %v226 = vcvt.s32.f32 %v224
    %s227 = sld [smem:[#allocation4 + $0x1]]
    %v228 = vstv %s227
    %v229 = vmul.f32 %v172, %v228
    %v230 = vmul.f32 %v173, %v228
    %s231 = sld [smem:[#allocation4 + $0x81]]
    %v232 = vstv %s231
    %v233 = vmul.f32 %v184, %v232
    %v234 = vmul.f32 %v185, %v232
    %v235 = vadd.f32 %v229, %v233
    %v236 = vadd.f32 %v230, %v234
    %s237 = sld [smem:[#allocation4 + $0x101]]
    %v238 = vstv %s237
    %v239 = vmul.f32 %v196, %v238
    %v240 = vmul.f32 %v197, %v238
    %v241 = vadd.f32 %v235, %v239
    %v242 = vadd.f32 %v236, %v240
    %vm243 = vcmp.eq.s32.totalorder %v219, 0
    %vm244 = vcmp.eq.s32.totalorder %v220, 0
    %v245 = vsel %vm243, 1, 0
    %v246 = vsel %vm244, 1, 0
    %v247 = vcvt.s32.f32 %v245
    %v248 = vcvt.s32.f32 %v246
    %vm249 = vcmask 130048
    %v251 = vsel %vm249, %v247, 0
    %v254 = vsel %vm249, %v248, 0
    %256 = vmatprep.subr.mxu0 0.0
    %257 = vmatpush1.msra.mxu0 0.0
    %258 = vmatprep.subr.mxu0 0.0
    %259 = vmatpush1.msra.mxu0 0.0
    %260 = vmatprep.subr.mxu0 0.0
    %261 = vmatpush1.msra.mxu0 0.0
    %262 = vmatprep.subr.mxu0 0.0
    %263 = vmatpush1.msra.mxu0 0.0
    %264 = vmatprep.subr.mxu0 0.0
    %265 = vmatpush1.msra.mxu0 0.0
    %266 = vmatprep.subr.mxu0 0.0
    %267 = vmatpush1.msra.mxu0 0.0
    %268 = vmatprep.subr.mxu0 0.0
    %269 = vmatpush1.msra.mxu0 0.0
    %270 = vmatprep.subr.mxu0 0.0
    %271 = vmatpush1.msra.mxu0 0.0
    %272 = vmatprep.subr.mxu0 0.0
    %273 = vmatpush1.msra.mxu0 0.0
    %274 = vmatprep.subr.mxu0 0.0
    %275 = vmatpush1.msra.mxu0 0.0
    %276 = vmatprep.subr.mxu0 0.0
    %277 = vmatpush1.msra.mxu0 0.0
    %278 = vmatprep.subr.mxu0 0.0
    %279 = vmatpush1.msra.mxu0 0.0
    %280 = vmatprep.subr.mxu0 0.0
    %281 = vmatpush1.msra.mxu0 0.0
    %282 = vmatprep.subr.mxu0 0.0
    %283 = vmatpush1.msra.mxu0 0.0
    %284 = vmatprep.subr.mxu0 0.0
    %285 = vmatpush1.msra.mxu0 %v242
    %286 = vmatprep.subr.mxu0 0.0
    %287 = vmatpush1.msra.mxu0 %v241
    %288 = vmatprep.subr.mxu0 0.0
    %289 = vmatpush2.msra.mxu0 0.0
    %290 = vmatprep.subr.mxu0 0.0
    %291 = vmatpush2.msra.mxu0 0.0
    %292 = vmatprep.subr.mxu0 0.0
    %293 = vmatpush2.msra.mxu0 0.0
    %294 = vmatprep.subr.mxu0 0.0
    %295 = vmatpush2.msra.mxu0 0.0
    %296 = vmatprep.subr.mxu0 0.0
    %297 = vmatpush2.msra.mxu0 0.0
    %298 = vmatprep.subr.mxu0 0.0
    %299 = vmatpush2.msra.mxu0 0.0
    %300 = vmatprep.subr.mxu0 0.0
    %301 = vmatpush2.msra.mxu0 0.0
    %302 = vmatprep.subr.mxu0 0.0
    %303 = vmatpush2.msra.mxu0 0.0
    %304 = vmatprep.subr.mxu0 0.0
    %305 = vmatpush2.msra.mxu0 0.0
    %306 = vmatprep.subr.mxu0 0.0
    %307 = vmatpush2.msra.mxu0 0.0
    %308 = vmatprep.subr.mxu0 0.0
    %309 = vmatpush2.msra.mxu0 0.0
    %310 = vmatprep.subr.mxu0 0.0
    %311 = vmatpush2.msra.mxu0 0.0
    %312 = vmatprep.subr.mxu0 0.0
    %313 = vmatpush2.msra.mxu0 0.0
    %314 = vmatprep.subr.mxu0 0.0
    %315 = vmatpush2.msra.mxu0 0.0
    %316 = vmatprep.subr.mxu0 0.0
    %317 = vmatpush2.msra.mxu0 0.0
    %318 = vmatprep.subr.mxu0 0.0
    %319 = vmatpush2.msra.mxu0 0.0
    %320 = vmatprep.mubr.f32.mxu0 0.0
    %321 = vmatmul.mubr.f32.gmra.mxu0 %v251
    %v322 = vpop.f32.mrf.mxu0
    %v323 = vadd.f32 0.0, %v322
    %v324 = vpop.f32.mrf.mxu0
    %325 = vmatprep.mubr.f32.mxu0 0.0
    %326 = vmatmul.mubr.f32.gmra.mxu0 %v254
    %v327 = vpop.f32.mrf.mxu0
    %v328 = vadd.f32 0.0, %v327
    %v329 = vpop.f32.mrf.mxu0
    %330 = vdwg.mxu0
    %v332 = vsel %vm249, %v225, 0
    %v335 = vsel %vm249, %v226, 0
    %337 = vmatprep.subr.mxu0 0.0
    %338 = vmatpush1.msra.mxu0 0.0
    %339 = vmatprep.subr.mxu0 0.0
    %340 = vmatpush1.msra.mxu0 0.0
    %341 = vmatprep.subr.mxu0 0.0
    %342 = vmatpush1.msra.mxu0 0.0
    %343 = vmatprep.subr.mxu0 0.0
    %344 = vmatpush1.msra.mxu0 0.0
    %345 = vmatprep.subr.mxu0 0.0
    %346 = vmatpush1.msra.mxu0 0.0
    %347 = vmatprep.subr.mxu0 0.0
    %348 = vmatpush1.msra.mxu0 0.0
    %349 = vmatprep.subr.mxu0 0.0
    %350 = vmatpush1.msra.mxu0 0.0
    %351 = vmatprep.subr.mxu0 0.0
    %352 = vmatpush1.msra.mxu0 0.0
    %353 = vmatprep.subr.mxu0 0.0
    %354 = vmatpush1.msra.mxu0 0.0
    %355 = vmatprep.subr.mxu0 0.0
    %356 = vmatpush1.msra.mxu0 0.0
    %357 = vmatprep.subr.mxu0 0.0
    %358 = vmatpush1.msra.mxu0 0.0
    %359 = vmatprep.subr.mxu0 0.0
    %360 = vmatpush1.msra.mxu0 0.0
    %361 = vmatprep.subr.mxu0 0.0
    %362 = vmatpush1.msra.mxu0 0.0
    %363 = vmatprep.subr.mxu0 0.0
    %364 = vmatpush1.msra.mxu0 0.0
    %365 = vmatprep.subr.mxu0 0.0
    %366 = vmatpush1.msra.mxu0 %v218
    %367 = vmatprep.subr.mxu0 0.0
    %368 = vmatpush1.msra.mxu0 %v217
    %369 = vmatprep.subr.mxu0 0.0
    %370 = vmatpush2.msra.mxu0 0.0
    %371 = vmatprep.subr.mxu0 0.0
    %372 = vmatpush2.msra.mxu0 0.0
    %373 = vmatprep.subr.mxu0 0.0
    %374 = vmatpush2.msra.mxu0 0.0
    %375 = vmatprep.subr.mxu0 0.0
    %376 = vmatpush2.msra.mxu0 0.0
    %377 = vmatprep.subr.mxu0 0.0
    %378 = vmatpush2.msra.mxu0 0.0
    %379 = vmatprep.subr.mxu0 0.0
    %380 = vmatpush2.msra.mxu0 0.0
    %381 = vmatprep.subr.mxu0 0.0
    %382 = vmatpush2.msra.mxu0 0.0
    %383 = vmatprep.subr.mxu0 0.0
    %384 = vmatpush2.msra.mxu0 0.0
    %385 = vmatprep.subr.mxu0 0.0
    %386 = vmatpush2.msra.mxu0 0.0
    %387 = vmatprep.subr.mxu0 0.0
    %388 = vmatpush2.msra.mxu0 0.0
    %389 = vmatprep.subr.mxu0 0.0
    %390 = vmatpush2.msra.mxu0 0.0
    %391 = vmatprep.subr.mxu0 0.0
    %392 = vmatpush2.msra.mxu0 0.0
    %393 = vmatprep.subr.mxu0 0.0
    %394 = vmatpush2.msra.mxu0 0.0
    %395 = vmatprep.subr.mxu0 0.0
    %396 = vmatpush2.msra.mxu0 0.0
    %397 = vmatprep.subr.mxu0 0.0
    %398 = vmatpush2.msra.mxu0 0.0
    %399 = vmatprep.subr.mxu0 0.0
    %400 = vmatpush2.msra.mxu0 0.0
    %401 = vmatprep.mubr.f32.mxu0 0.0
    %402 = vmatmul.mubr.f32.gmra.mxu0 %v332
    %v403 = vpop.f32.mrf.mxu0
    %v404 = vadd.f32 %v323, %v403
    %v405 = vpop.f32.mrf.mxu0
    %406 = vmatprep.mubr.f32.mxu0 0.0
    %407 = vmatmul.mubr.f32.gmra.mxu0 %v335
    %v408 = vpop.f32.mrf.mxu0
    %v409 = vadd.f32 %v328, %v408
    %v410 = vpop.f32.mrf.mxu0
    %411 = vdwg.mxu0
    %s412 = sld [smem:[#allocation4 + $0x2]]
    %v413 = vstv %s412
    %v414 = vmul.f32 %v172, %v413
    %v415 = vmul.f32 %v173, %v413
    %s416 = sld [smem:[#allocation4 + $0x82]]
    %v417 = vstv %s416
    %v418 = vmul.f32 %v184, %v417
    %v419 = vmul.f32 %v185, %v417
    %v420 = vadd.f32 %v414, %v418
    %v421 = vadd.f32 %v415, %v419
    %s422 = sld [smem:[#allocation4 + $0x102]]
    %v423 = vstv %s422
    %v424 = vmul.f32 %v196, %v423
    %v425 = vmul.f32 %v197, %v423
    %v426 = vadd.f32 %v420, %v424
    %v427 = vadd.f32 %v421, %v425
    %vm428 = vcmp.eq.s32.totalorder %v219, 1
    %vm429 = vcmp.eq.s32.totalorder %v220, 1
    %v430 = vsel %vm428, 1, 0
    %v431 = vsel %vm429, 1, 0
    %v432 = vcvt.s32.f32 %v430
    %v433 = vcvt.s32.f32 %v431
    %v435 = vsel %vm249, %v432, 0
    %v438 = vsel %vm249, %v433, 0
    %440 = vmatprep.subr.mxu0 0.0
    %441 = vmatpush1.msra.mxu0 0.0
    %442 = vmatprep.subr.mxu0 0.0
    %443 = vmatpush1.msra.mxu0 0.0
    %444 = vmatprep.subr.mxu0 0.0
    %445 = vmatpush1.msra.mxu0 0.0
    %446 = vmatprep.subr.mxu0 0.0
    %447 = vmatpush1.msra.mxu0 0.0
    %448 = vmatprep.subr.mxu0 0.0
    %449 = vmatpush1.msra.mxu0 0.0
    %450 = vmatprep.subr.mxu0 0.0
    %451 = vmatpush1.msra.mxu0 0.0
    %452 = vmatprep.subr.mxu0 0.0
    %453 = vmatpush1.msra.mxu0 0.0
    %454 = vmatprep.subr.mxu0 0.0
    %455 = vmatpush1.msra.mxu0 0.0
    %456 = vmatprep.subr.mxu0 0.0
    %457 = vmatpush1.msra.mxu0 0.0
    %458 = vmatprep.subr.mxu0 0.0
    %459 = vmatpush1.msra.mxu0 0.0
    %460 = vmatprep.subr.mxu0 0.0
    %461 = vmatpush1.msra.mxu0 0.0
    %462 = vmatprep.subr.mxu0 0.0
    %463 = vmatpush1.msra.mxu0 0.0
    %464 = vmatprep.subr.mxu0 0.0
    %465 = vmatpush1.msra.mxu0 0.0
    %466 = vmatprep.subr.mxu0 0.0
    %467 = vmatpush1.msra.mxu0 0.0
    %468 = vmatprep.subr.mxu0 0.0
    %469 = vmatpush1.msra.mxu0 %v427
    %470 = vmatprep.subr.mxu0 0.0
    %471 = vmatpush1.msra.mxu0 %v426
    %472 = vmatprep.subr.mxu0 0.0
    %473 = vmatpush2.msra.mxu0 0.0
    %474 = vmatprep.subr.mxu0 0.0
    %475 = vmatpush2.msra.mxu0 0.0
    %476 = vmatprep.subr.mxu0 0.0
    %477 = vmatpush2.msra.mxu0 0.0
    %478 = vmatprep.subr.mxu0 0.0
    %479 = vmatpush2.msra.mxu0 0.0
    %480 = vmatprep.subr.mxu0 0.0
    %481 = vmatpush2.msra.mxu0 0.0
    %482 = vmatprep.subr.mxu0 0.0
    %483 = vmatpush2.msra.mxu0 0.0
    %484 = vmatprep.subr.mxu0 0.0
    %485 = vmatpush2.msra.mxu0 0.0
    %486 = vmatprep.subr.mxu0 0.0
    %487 = vmatpush2.msra.mxu0 0.0
    %488 = vmatprep.subr.mxu0 0.0
    %489 = vmatpush2.msra.mxu0 0.0
    %490 = vmatprep.subr.mxu0 0.0
    %491 = vmatpush2.msra.mxu0 0.0
    %492 = vmatprep.subr.mxu0 0.0
    %493 = vmatpush2.msra.mxu0 0.0
    %494 = vmatprep.subr.mxu0 0.0
    %495 = vmatpush2.msra.mxu0 0.0
    %496 = vmatprep.subr.mxu0 0.0
    %497 = vmatpush2.msra.mxu0 0.0
    %498 = vmatprep.subr.mxu0 0.0
    %499 = vmatpush2.msra.mxu0 0.0
    %500 = vmatprep.subr.mxu0 0.0
    %501 = vmatpush2.msra.mxu0 0.0
    %502 = vmatprep.subr.mxu0 0.0
    %503 = vmatpush2.msra.mxu0 0.0
    %504 = vmatprep.mubr.f32.mxu0 0.0
    %505 = vmatmul.mubr.f32.gmra.mxu0 %v435
    %v506 = vpop.f32.mrf.mxu0
    %v507 = vadd.f32 0.0, %v506
    %v508 = vpop.f32.mrf.mxu0
    %509 = vmatprep.mubr.f32.mxu0 0.0
    %510 = vmatmul.mubr.f32.gmra.mxu0 %v438
    %v511 = vpop.f32.mrf.mxu0
    %v512 = vadd.f32 0.0, %v511
    %v513 = vpop.f32.mrf.mxu0
    %514 = vdwg.mxu0
    %v515 = vadd.f32 %v404, %v507
    %v516 = vadd.f32 %v409, %v512
    %v517 = vsub.f32 0.0, %v515
    %v518 = vsub.f32 0.0, %v516
    %v519 = vmul.f32 %v517, 1.442695
    %v520 = vpow.pop %v519
    %v521 = vmul.f32 %v518, 1.442695
    %v522 = vpow.pop %v521
    %v523 = vadd.f32 %v520, 1.0
    %v524 = vadd.f32 %v522, 1.0
    %v525 = vrcp.pop %v523
    %v526 = vmul.f32 1.0, %v525
    %v527 = vrcp.pop %v524
    %v528 = vmul.f32 1.0, %v527
    %v529 = vld [vmem:[%s1] sm:$0xff]
    %v530 = vld [vmem:[%s1 + $0x8] sm:$0xff]
    %v531 = vld [vmem:[%s2] sm:$0xff]
    %v532 = vld [vmem:[%s2 + $0x8] sm:$0xff]
    %v533 = vadd.f32 %v103, 1e-05
    %v534 = vadd.f32 %v104, 1e-05
    %v535 = vrsqrt.pop %v533
    %v536 = vrsqrt.pop %v534
    %v537 = vmul.f32 %v529, %v535
    %v538 = vmul.f32 %v530, %v536
    %v539 = vmul.f32 %v537, %v526
    %v540 = vmul.f32 %v538, %v528
    %v541 = vmul.f32 %v529, %v95
    %v542 = vmul.f32 %v530, %v96
    %v543 = vmul.f32 %v541, %v535
    %v544 = vmul.f32 %v542, %v536
    %v545 = vsub.f32 %v531, %v543
    %v546 = vsub.f32 %v532, %v544
    %v547 = vmul.f32 %v545, %v526
    %v548 = vmul.f32 %v546, %v528
    %550 = vset.pattern.permute.xlu0 0
    %551 = vperm.xlu0 %550, %v539
    %v552 = vpop.permute.xlu0 %551
    %555 = vset.pattern.permute.xlu0 0
    %556 = vperm.xlu0 %555, %v540
    %v557 = vpop.permute.xlu0 %556
    %v559 = vmul.f32 %v51, %v552
    %v560 = vmul.f32 %v52, %v552
    %v561 = vmul.f32 %v53, %v557
    %v562 = vmul.f32 %v54, %v557
    %v563 = vmul.f32 %v55, %v552
    %v564 = vmul.f32 %v56, %v552
    %v565 = vmul.f32 %v57, %v557
    %v566 = vmul.f32 %v58, %v557
    %568 = vset.pattern.permute.xlu0 0
    %569 = vperm.xlu0 %568, %v547
    %v570 = vpop.permute.xlu0 %569
    %573 = vset.pattern.permute.xlu0 0
    %574 = vperm.xlu0 %573, %v548
    %v575 = vpop.permute.xlu0 %574
    %v577 = vadd.f32 %v559, %v570
    %v578 = vadd.f32 %v560, %v570
    %v579 = vadd.f32 %v561, %v575
    %v580 = vadd.f32 %v562, %v575
    %v581 = vadd.f32 %v563, %v570
    %v582 = vadd.f32 %v564, %v570
    %v583 = vadd.f32 %v565, %v575
    %v584 = vadd.f32 %v566, %v575
    %585 = vst [vmem:[%s7] sm:$0xff] %v577
    %586 = vst [vmem:[%s7 + $0x8] sm:$0xff] %v578
    %587 = vst [vmem:[%s7 + $0x10] sm:$0xff] %v579
    %588 = vst [vmem:[%s7 + $0x18] sm:$0xff] %v580
    %589 = vst [vmem:[%s7 + $0x20] sm:$0xff] %v581
    %590 = vst [vmem:[%s7 + $0x28] sm:$0xff] %v582
    %591 = vst [vmem:[%s7 + $0x30] sm:$0xff] %v583
    %592 = vst [vmem:[%s7 + $0x38] sm:$0xff] %v584
    // Predicated region
    $region38: #{newbn_forward.1} parent=1 // pred_check
      _
    $region39: #{newbn_forward.1} parent=1 // pred_check_branch
      %594 = sbr.rel (0) target = $region41
    $region40: #{newbn_forward.1} parent=1 // pred_region
      _
    $region41: #{newbn_forward.1} parent=1 // pred_fallthru
      _
    // Predicated region
    $region42: #{newbn_forward.1} parent=1 // pred_check
      _
    $region43: #{newbn_forward.1} parent=1 // pred_check_branch
      %596 = sbr.rel (0) target = $region45
    $region44: #{newbn_forward.1} parent=1 // pred_region
      _
    $region45: #{newbn_forward.1} parent=1 // pred_fallthru
      _
    %597 = vsyncpa [#allocation3], 1
    %598 = vsyncpa [#allocation5], 1

</llo_original>
